<compile_context>
chip_gen: v6e
topology: v6e:2x2x1
jax: 0.10.0
libtpu: 0.0.40
codegen_flags: <defaults>
</compile_context>

<pallas_src>
import functools
import math

import jax
import jax.numpy as jnp
from jax.experimental import pallas as pl
from jax.experimental.pallas import tpu as pltpu


def _gaussian_1d(window_size: int = 3, sigma: float = 1.5):
    """Normalized 1D Gaussian, identical to torchgeometry's get_gaussian_kernel.
    The 2D window is its outer product, so the blur is exactly separable."""
    xs = [i - window_size // 2 for i in range(window_size)]
    g = [math.exp(-(v * v) / (2.0 * sigma * sigma)) for v in xs]
    s = sum(g)
    return [v / s for v in g]


def _vmem_budget_bytes():
    """(tile-sizing budget, vmem_limit_bytes) chosen per TPU generation."""
    vmem_cap = 64 << 20                       # conservative default (v7x-like)
    try:
        info = pltpu.get_tpu_info()
        vmem_cap = int(getattr(info, "vmem_capacity_bytes", vmem_cap) or vmem_cap)
    except Exception:
        pass
    if vmem_cap >= (100 << 20):               # v5e / v6e: 128 MiB physical VMEM
        return 36 << 20, 96 << 20
    return 20 << 20, 56 << 20                 # v7x: 64 MiB physical VMEM


def _choose_row_tile(H, wc_pad, row_tile=None,
                     vmem_budget_bytes=20 << 20, live_factor=14):
    """Pick a row-tile height (multiple of 8) and the padded row count.

    live_factor ~= number of simultaneously-live (TH, WCp) f32 arrays
    (double-buffered inputs + extended blur/ssim temporaries)."""
    if row_tile is not None:
        th = max(8, (row_tile // 8) * 8)
        hp = ((H + th - 1) // th) * th
        return th, hp
    cap = vmem_budget_bytes // (live_factor * wc_pad * 4)
    cap = max(8, min(512, (cap // 8) * 8))
    if H % 8 == 0:
        best, d = 8, 8
        lim = min(cap, H)
        while d <= lim:
            if H % d == 0:
                best = d
            d += 8
        # Keep the exact divisor only if it is reasonably close to the cap;
        # otherwise padding + last-tile masking with a near-cap tile is cheaper
        # (avoids the TH=8 degenerate case for H = 8 * prime).
        if 2 * best >= min(cap, H):
            return best, H
    th = min(cap, ((H + 7) // 8) * 8)
    hp = ((H + th - 1) // th) * th
    return th, hp


def _ssim_kernel(xm_ref, xp_ref, xn_ref, ym_ref, yp_ref, yn_ref, out_ref, *,
                 C, H, TH, WC, WC_pad, g0, g1, c1, c2, mask_rows):
    r = pl.program_id(1)
    n_r = pl.num_programs(1)
    f32 = jnp.float32
    PAD = WC_pad - WC            # >= C by construction
    THE = TH + 8                 # extended rows: [tile | x_bot, 0*6, x_top]

    # Load + cast in-kernel (HBM traffic stays at the input's native width).
    x = xm_ref[...].astype(f32)                         # (TH, WC)
    y = ym_ref[...].astype(f32)
    # Halo rows: image row above / below this tile; forced to zero at the
    # image top/bottom border (== conv2d zero padding).  jnp.where (not *0.0)
    # so NaN/Inf in a clamped border halo block cannot leak in.
    x_top = jnp.where(r > 0, xp_ref[7:8, :].astype(f32), 0.0)        # (1, WC)
    y_top = jnp.where(r > 0, yp_ref[7:8, :].astype(f32), 0.0)
    x_bot = jnp.where(r < n_r - 1, xn_ref[0:1, :].astype(f32), 0.0)
    y_bot = jnp.where(r < n_r - 1, yn_ref[0:1, :].astype(f32), 0.0)

    # Build the roll-friendly extended block:
    #   rows [0, TH)  : the tile
    #   row  TH       : halo row below  (wraps into row TH-1 under a +/-1 roll)
    #   rows TH+1..+6 : zero spacer (don't care, masked out of the sum)
    #   row  TH+7     : halo row above  (wraps into row 0 under a +/-1 roll)
    # plus >= C zero lanes on the right so the +/-C lane rolls wrap zeros in
    # (== conv2d zero padding at the left/right image edge).  Both dims of the
    # extended block are (8,128)-aligned, as required by the XLU rotations.
    zmid = jnp.zeros((6, WC), f32)
    zpad = jnp.zeros((THE, PAD), f32)
    xe = jnp.concatenate(
        [jnp.concatenate([x, x_bot, zmid, x_top], axis=0), zpad], axis=1)
    ye = jnp.concatenate(
        [jnp.concatenate([y, y_bot, zmid, y_top], axis=0), zpad], axis=1)

    def vblur(q):
        # 3-tap vertical blur via XLU sublane rolls.  The symmetric sum of the
        # +1 and -(1) rotations makes the result independent of the roll
        # direction convention; the extended rows supply the halo taps.
        return g0 * (pltpu.roll(q, 1, axis=0) +
                     pltpu.roll(q, THE - 1, axis=0)) + g1 * q

    def hblur(v):
        # 3-tap horizontal blur via XLU lane rolls (+/-C == one pixel at the
        # same channel).  The >= C zero pad lanes make the wrapped lanes zero,
        # so no edge masks are needed (again roll-direction agnostic).
        return g0 * (pltpu.roll(v, C, axis=1) +
                     pltpu.roll(v, WC_pad - C, axis=1)) + g1 * v

    mu1 = hblur(vblur(xe))
    mu2 = hblur(vblur(ye))
    e11 = hblur(vblur(xe * xe))
    e22 = hblur(vblur(ye * ye))
    e12 = hblur(vblur(xe * ye))

    mu11 = mu1 * mu1
    mu22 = mu2 * mu2
    mu12 = mu1 * mu2

    num = (2.0 * mu12 + c1) * (2.0 * (e12 - mu12) + c2)
    den = (mu11 + mu22 + c1) * ((e11 - mu11) + (e22 - mu22) + c2)
    inv = pl.reciprocal(den, approx=True)
    inv = inv * (2.0 - den * inv)            # one Newton step -> ~f32 accuracy
    ssim = num * inv

    loss = jnp.clip(1.0 - ssim, 0.0, 1.0) * 0.5

    # Hoisted validity mask: drop the spacer/halo rows and the zero pad lanes.
    row = jax.lax.broadcasted_iota(jnp.int32, (THE, WC_pad), 0)
    lane = jax.lax.broadcasted_iota(jnp.int32, (THE, WC_pad), 1)
    valid = (row < TH) & (lane < WC)

    out_ref[...] = jnp.sum(jnp.where(valid, loss, 0.0)).reshape(1, 1, 1, 1)

    if mask_rows:
        # Padded image rows only exist in the last row tile: mask them there
        # (and only there), keeping every other grid step mask-free.
        @pl.when(r == n_r - 1)
        def _():
            valid_last = valid & ((row + r * TH) < H)
            out_ref[...] = jnp.sum(
                jnp.where(valid_last, loss, 0.0)).reshape(1, 1, 1, 1)


def ssim_metric(pred, gt, H, W, row_tile=None):
    """pred, gt: (B, N_rays, 3) with N_rays == H*W.
    Returns the scalar mean DSSIM loss, matching the PyTorch SSIM metric
    (use_mask=False)."""
    B, n_rays, C = pred.shape
    assert n_rays == H * W, 'invalid shape. HW does not match n_rays...'
    WC = W * C
    WC_pad = ((WC + C + 127) // 128) * 128     # lane pad >= C, 128-aligned
    # Pure reshape: no transpose, no dtype cast, no extra HBM pass.
    p = pred.reshape(B, H, WC)
    g = gt.reshape(B, H, WC)

    budget, vmem_limit = _vmem_budget_bytes()
    TH, H_pad = _choose_row_tile(H, WC_pad, row_tile, vmem_budget_bytes=budget)
    if H_pad != H:                             # only if TH doesn't divide H
        p = jnp.pad(p, ((0, 0), (0, H_pad - H), (0, 0)))
        g = jnp.pad(g, ((0, 0), (0, H_pad - H), (0, 0)))
    n_r = H_pad // TH
    n8 = H_pad // 8

    g1d = _gaussian_1d(3, 1.5)
    kernel = functools.partial(
        _ssim_kernel, C=C, H=H, TH=TH, WC=WC, WC_pad=WC_pad,
        g0=g1d[0], g1=g1d[1], c1=(0.01 * 1.0) ** 2, c2=(0.03 * 1.0) ** 2,
        mask_rows=(H_pad != H))

    # Main tile plus 8-row halo blocks (clamped at the borders; the kernel
    # zeroes the halo row when it falls outside the image).
    main_map = lambda b, r: (b, r, 0)
    prev_map = lambda b, r: (b, jnp.maximum(r * (TH // 8) - 1, 0), 0)
    next_map = lambda b, r: (b, jnp.minimum((r + 1) * (TH // 8), n8 - 1), 0)

    main_spec = pl.BlockSpec((None, TH, WC), main_map)
    prev_spec = pl.BlockSpec((None, 8, WC), prev_map)
    next_spec = pl.BlockSpec((None, 8, WC), next_map)

    partial_sums = pl.pallas_call(
        kernel,
        out_shape=jax.ShapeDtypeStruct((B, n_r, 1, 1), jnp.float32),
        grid_spec=pltpu.PrefetchScalarGridSpec(
            num_scalar_prefetch=0,
            grid=(B, n_r),
            in_specs=[main_spec, prev_spec, next_spec,
                      main_spec, prev_spec, next_spec],
            out_specs=pl.BlockSpec((1, 1, 1, 1), lambda b, r: (b, r, 0, 0)),
        ),
        compiler_params=pltpu.CompilerParams(
            dimension_semantics=("parallel", "parallel"),
            vmem_limit_bytes=vmem_limit),
    )(p, p, p, g, g, g)

    # Mean over the (B, C, H, W) loss map -> divide by the number of *valid*
    # pixels only (padding rows/lanes are masked inside the kernel).
    return jnp.sum(partial_sums) / jnp.float32(B * C * H * W)


def _ssim_reference(pred, gt, H, W):
    """Pure-JAX reference: direct 9-tap NCHW translation of the torch module."""
    B, _, C = pred.shape
    p = pred.reshape(B, H, W, C).transpose(0, 3, 1, 2).reshape(B * C, H, W)
    g = gt.reshape(B, H, W, C).transpose(0, 3, 1, 2).reshape(B * C, H, W)
    pp = jnp.pad(p.astype(jnp.float32), ((0, 0), (1, 1), (1, 1)))
    gp = jnp.pad(g.astype(jnp.float32), ((0, 0), (1, 1), (1, 1)))
    g1d = _gaussian_1d(3, 1.5)
    w = [[g1d[i] * g1d[j] for j in range(3)] for i in range(3)]

    def blur(z):
        return sum(w[dy][dx] * z[:, dy:dy + H, dx:dx + W]
                   for dy in range(3) for dx in range(3))

    c1, c2 = 0.01 ** 2, 0.03 ** 2
    mu1, mu2 = blur(pp), blur(gp)
    s1 = blur(pp * pp) - mu1 * mu1
    s2 = blur(gp * gp) - mu2 * mu2
    s12 = blur(pp * gp) - mu1 * mu2
    ssim_map = ((2 * mu1 * mu2 + c1) * (2 * s12 + c2)) / (
        (mu1 * mu1 + mu2 * mu2 + c1) * (s1 + s2 + c2))
    return jnp.mean(jnp.clip(1.0 - ssim_map, 0.0, 1.0) * 0.5)


if __name__ == "__main__":
    # TODO(synk): use_mask=True branch (mean_tensor_by_mask) not implemented;
    # the default config (use_mask=False, key='rgb') is what this reproduces.
    B, H, W, C = 2, 16, 16, 3
    key = jax.random.PRNGKey(0)
    k1, k2 = jax.random.split(key)
    pred = jax.random.uniform(k1, (B, H * W, C), dtype=jnp.float32)  # output['rgb']
    gt = jax.random.uniform(k2, (B, H * W, C), dtype=jnp.float32)    # data['img']

    # row_tile=8 forces a multi-tile grid (2 batch x 2 row tiles) so the halo
    # exchange between row tiles is exercised even at this small test size.
    result = jax.block_until_ready(ssim_metric(pred, gt, H, W, row_tile=8))
    ref = jax.block_until_ready(_ssim_reference(pred, gt, H, W))
    assert jnp.allclose(result, ref, atol=1e-5, rtol=1e-5), (result, ref)
    print("KERNEL_OK")
</pallas_src>

<mosaic_0001>
module attributes {stable_mosaic.version = 11 : i64} {
  func.func @_ssim_kernel(%arg0: i32, %arg1: i32, %arg2: memref<1x8x48xf32, #tpu.memory_space<vmem>>, %arg3: memref<1x8x48xf32, #tpu.memory_space<vmem>>, %arg4: memref<1x8x48xf32, #tpu.memory_space<vmem>>, %arg5: memref<1x8x48xf32, #tpu.memory_space<vmem>>, %arg6: memref<1x8x48xf32, #tpu.memory_space<vmem>>, %arg7: memref<1x8x48xf32, #tpu.memory_space<vmem>>, %arg8: memref<1x1x1x1xf32, #tpu.memory_space<vmem>>) attributes {dimension_semantics = [#tpu.dimension_semantics<parallel>, #tpu.dimension_semantics<parallel>], iteration_bounds = array<i64: 2, 2>, scalar_prefetch = 0 : i64, scratch_operands = 0 : i64, tpu.core_type = #tpu.core_type<tc>, window_params = [{transform_indices = @transform_0, window_bounds = array<i64: 1, 8, 48>}, {transform_indices = @transform_1, window_bounds = array<i64: 1, 8, 48>}, {transform_indices = @transform_2, window_bounds = array<i64: 1, 8, 48>}, {transform_indices = @transform_3, window_bounds = array<i64: 1, 8, 48>}, {transform_indices = @transform_4, window_bounds = array<i64: 1, 8, 48>}, {transform_indices = @transform_5, window_bounds = array<i64: 1, 8, 48>}, {transform_indices = @transform_6, window_bounds = array<i64: 1, 1, 1, 1>}]} {
    %c0 = arith.constant 0 : index
    %c0_0 = arith.constant 0 : index
    %c0_1 = arith.constant 0 : index
    %0 = vector.load %arg2[%c0, %c0_0, %c0_1] : memref<1x8x48xf32, #tpu.memory_space<vmem>>, vector<1x8x48xf32>
    %1 = vector.shape_cast %0 : vector<1x8x48xf32> to vector<8x48xf32>
    %c0_2 = arith.constant 0 : index
    %c0_3 = arith.constant 0 : index
    %c0_4 = arith.constant 0 : index
    %2 = vector.load %arg5[%c0_2, %c0_3, %c0_4] : memref<1x8x48xf32, #tpu.memory_space<vmem>>, vector<1x8x48xf32>
    %3 = vector.shape_cast %2 : vector<1x8x48xf32> to vector<8x48xf32>
    %c0_i32 = arith.constant 0 : i32
    %4 = arith.cmpi sgt, %arg1, %c0_i32 : i32
    %c0_5 = arith.constant 0 : index
    %c7 = arith.constant 7 : index
    %c0_6 = arith.constant 0 : index
    %5 = vector.load %arg3[%c0_5, %c7, %c0_6] : memref<1x8x48xf32, #tpu.memory_space<vmem>>, vector<1x1x48xf32>
    %6 = vector.shape_cast %5 : vector<1x1x48xf32> to vector<1x48xf32>
    %cst = arith.constant 0.000000e+00 : f32
    %7 = vector.broadcast %cst : f32 to vector<1x48xf32>
    %8 = arith.select %4, %6, %7 : vector<1x48xf32>
    %c0_i32_7 = arith.constant 0 : i32
    %9 = arith.cmpi sgt, %arg1, %c0_i32_7 : i32
    %c0_8 = arith.constant 0 : index
    %c7_9 = arith.constant 7 : index
    %c0_10 = arith.constant 0 : index
    %10 = vector.load %arg6[%c0_8, %c7_9, %c0_10] : memref<1x8x48xf32, #tpu.memory_space<vmem>>, vector<1x1x48xf32>
    %11 = vector.shape_cast %10 : vector<1x1x48xf32> to vector<1x48xf32>
    %cst_11 = arith.constant 0.000000e+00 : f32
    %12 = vector.broadcast %cst_11 : f32 to vector<1x48xf32>
    %13 = arith.select %9, %11, %12 : vector<1x48xf32>
    %c1_i32 = arith.constant 1 : i32
    %14 = arith.cmpi slt, %arg1, %c1_i32 : i32
    %c0_12 = arith.constant 0 : index
    %c0_13 = arith.constant 0 : index
    %c0_14 = arith.constant 0 : index
    %15 = vector.load %arg4[%c0_12, %c0_13, %c0_14] : memref<1x8x48xf32, #tpu.memory_space<vmem>>, vector<1x1x48xf32>
    %16 = vector.shape_cast %15 : vector<1x1x48xf32> to vector<1x48xf32>
    %cst_15 = arith.constant 0.000000e+00 : f32
    %17 = vector.broadcast %cst_15 : f32 to vector<1x48xf32>
    %18 = arith.select %14, %16, %17 : vector<1x48xf32>
    %c1_i32_16 = arith.constant 1 : i32
    %19 = arith.cmpi slt, %arg1, %c1_i32_16 : i32
    %c0_17 = arith.constant 0 : index
    %c0_18 = arith.constant 0 : index
    %c0_19 = arith.constant 0 : index
    %20 = vector.load %arg7[%c0_17, %c0_18, %c0_19] : memref<1x8x48xf32, #tpu.memory_space<vmem>>, vector<1x1x48xf32>
    %21 = vector.shape_cast %20 : vector<1x1x48xf32> to vector<1x48xf32>
    %cst_20 = arith.constant 0.000000e+00 : f32
    %22 = vector.broadcast %cst_20 : f32 to vector<1x48xf32>
    %23 = arith.select %19, %21, %22 : vector<1x48xf32>
    %cst_21 = arith.constant 0.000000e+00 : f32
    %24 = vector.broadcast %cst_21 : f32 to vector<6x48xf32>
    %cst_22 = arith.constant 0.000000e+00 : f32
    %25 = vector.broadcast %cst_22 : f32 to vector<16x80xf32>
    %26 = tpu.concatenate %1, %18, %24, %8 in 0 : vector<8x48xf32>, vector<1x48xf32>, vector<6x48xf32>, vector<1x48xf32> -> vector<16x48xf32>
    %27 = tpu.concatenate %26, %25 in 1 : vector<16x48xf32>, vector<16x80xf32> -> vector<16x128xf32>
    %28 = tpu.concatenate %3, %23, %24, %13 in 0 : vector<8x48xf32>, vector<1x48xf32>, vector<6x48xf32>, vector<1x48xf32> -> vector<16x48xf32>
    %29 = tpu.concatenate %28, %25 in 1 : vector<16x48xf32>, vector<16x80xf32> -> vector<16x128xf32>
    %c1_i32_23 = arith.constant 1 : i32
    %30 = tpu.dynamic_rotate %27 by %c1_i32_23 dim 0 : vector<16x128xf32>, i32 -> vector<16x128xf32>
    %c15_i32 = arith.constant 15 : i32
    %31 = tpu.dynamic_rotate %27 by %c15_i32 dim 0 : vector<16x128xf32>, i32 -> vector<16x128xf32>
    %32 = arith.addf %30, %31 : vector<16x128xf32>
    %cst_24 = arith.constant 0.307801336 : f32
    %33 = vector.broadcast %cst_24 : f32 to vector<16x128xf32>
    %34 = arith.mulf %33, %32 : vector<16x128xf32>
    %cst_25 = arith.constant 0.384397328 : f32
    %35 = vector.broadcast %cst_25 : f32 to vector<16x128xf32>
    %36 = arith.mulf %35, %27 : vector<16x128xf32>
    %37 = arith.addf %34, %36 : vector<16x128xf32>
    %c3_i32 = arith.constant 3 : i32
    %38 = tpu.dynamic_rotate %37 by %c3_i32 dim 1 : vector<16x128xf32>, i32 -> vector<16x128xf32>
    %c125_i32 = arith.constant 125 : i32
    %39 = tpu.dynamic_rotate %37 by %c125_i32 dim 1 : vector<16x128xf32>, i32 -> vector<16x128xf32>
    %40 = arith.addf %38, %39 : vector<16x128xf32>
    %cst_26 = arith.constant 0.307801336 : f32
    %41 = vector.broadcast %cst_26 : f32 to vector<16x128xf32>
    %42 = arith.mulf %41, %40 : vector<16x128xf32>
    %cst_27 = arith.constant 0.384397328 : f32
    %43 = vector.broadcast %cst_27 : f32 to vector<16x128xf32>
    %44 = arith.mulf %43, %37 : vector<16x128xf32>
    %45 = arith.addf %42, %44 : vector<16x128xf32>
    %c1_i32_28 = arith.constant 1 : i32
    %46 = tpu.dynamic_rotate %29 by %c1_i32_28 dim 0 : vector<16x128xf32>, i32 -> vector<16x128xf32>
    %c15_i32_29 = arith.constant 15 : i32
    %47 = tpu.dynamic_rotate %29 by %c15_i32_29 dim 0 : vector<16x128xf32>, i32 -> vector<16x128xf32>
    %48 = arith.addf %46, %47 : vector<16x128xf32>
    %cst_30 = arith.constant 0.307801336 : f32
    %49 = vector.broadcast %cst_30 : f32 to vector<16x128xf32>
    %50 = arith.mulf %49, %48 : vector<16x128xf32>
    %cst_31 = arith.constant 0.384397328 : f32
    %51 = vector.broadcast %cst_31 : f32 to vector<16x128xf32>
    %52 = arith.mulf %51, %29 : vector<16x128xf32>
    %53 = arith.addf %50, %52 : vector<16x128xf32>
    %c3_i32_32 = arith.constant 3 : i32
    %54 = tpu.dynamic_rotate %53 by %c3_i32_32 dim 1 : vector<16x128xf32>, i32 -> vector<16x128xf32>
    %c125_i32_33 = arith.constant 125 : i32
    %55 = tpu.dynamic_rotate %53 by %c125_i32_33 dim 1 : vector<16x128xf32>, i32 -> vector<16x128xf32>
    %56 = arith.addf %54, %55 : vector<16x128xf32>
    %cst_34 = arith.constant 0.307801336 : f32
    %57 = vector.broadcast %cst_34 : f32 to vector<16x128xf32>
    %58 = arith.mulf %57, %56 : vector<16x128xf32>
    %cst_35 = arith.constant 0.384397328 : f32
    %59 = vector.broadcast %cst_35 : f32 to vector<16x128xf32>
    %60 = arith.mulf %59, %53 : vector<16x128xf32>
    %61 = arith.addf %58, %60 : vector<16x128xf32>
    %62 = arith.mulf %27, %27 : vector<16x128xf32>
    %c1_i32_36 = arith.constant 1 : i32
    %63 = tpu.dynamic_rotate %62 by %c1_i32_36 dim 0 : vector<16x128xf32>, i32 -> vector<16x128xf32>
    %c15_i32_37 = arith.constant 15 : i32
    %64 = tpu.dynamic_rotate %62 by %c15_i32_37 dim 0 : vector<16x128xf32>, i32 -> vector<16x128xf32>
    %65 = arith.addf %63, %64 : vector<16x128xf32>
    %cst_38 = arith.constant 0.307801336 : f32
    %66 = vector.broadcast %cst_38 : f32 to vector<16x128xf32>
    %67 = arith.mulf %66, %65 : vector<16x128xf32>
    %cst_39 = arith.constant 0.384397328 : f32
    %68 = vector.broadcast %cst_39 : f32 to vector<16x128xf32>
    %69 = arith.mulf %68, %62 : vector<16x128xf32>
    %70 = arith.addf %67, %69 : vector<16x128xf32>
    %c3_i32_40 = arith.constant 3 : i32
    %71 = tpu.dynamic_rotate %70 by %c3_i32_40 dim 1 : vector<16x128xf32>, i32 -> vector<16x128xf32>
    %c125_i32_41 = arith.constant 125 : i32
    %72 = tpu.dynamic_rotate %70 by %c125_i32_41 dim 1 : vector<16x128xf32>, i32 -> vector<16x128xf32>
    %73 = arith.addf %71, %72 : vector<16x128xf32>
    %cst_42 = arith.constant 0.307801336 : f32
    %74 = vector.broadcast %cst_42 : f32 to vector<16x128xf32>
    %75 = arith.mulf %74, %73 : vector<16x128xf32>
    %cst_43 = arith.constant 0.384397328 : f32
    %76 = vector.broadcast %cst_43 : f32 to vector<16x128xf32>
    %77 = arith.mulf %76, %70 : vector<16x128xf32>
    %78 = arith.addf %75, %77 : vector<16x128xf32>
    %79 = arith.mulf %29, %29 : vector<16x128xf32>
    %c1_i32_44 = arith.constant 1 : i32
    %80 = tpu.dynamic_rotate %79 by %c1_i32_44 dim 0 : vector<16x128xf32>, i32 -> vector<16x128xf32>
    %c15_i32_45 = arith.constant 15 : i32
    %81 = tpu.dynamic_rotate %79 by %c15_i32_45 dim 0 : vector<16x128xf32>, i32 -> vector<16x128xf32>
    %82 = arith.addf %80, %81 : vector<16x128xf32>
    %cst_46 = arith.constant 0.307801336 : f32
    %83 = vector.broadcast %cst_46 : f32 to vector<16x128xf32>
    %84 = arith.mulf %83, %82 : vector<16x128xf32>
    %cst_47 = arith.constant 0.384397328 : f32
    %85 = vector.broadcast %cst_47 : f32 to vector<16x128xf32>
    %86 = arith.mulf %85, %79 : vector<16x128xf32>
    %87 = arith.addf %84, %86 : vector<16x128xf32>
    %c3_i32_48 = arith.constant 3 : i32
    %88 = tpu.dynamic_rotate %87 by %c3_i32_48 dim 1 : vector<16x128xf32>, i32 -> vector<16x128xf32>
    %c125_i32_49 = arith.constant 125 : i32
    %89 = tpu.dynamic_rotate %87 by %c125_i32_49 dim 1 : vector<16x128xf32>, i32 -> vector<16x128xf32>
    %90 = arith.addf %88, %89 : vector<16x128xf32>
    %cst_50 = arith.constant 0.307801336 : f32
    %91 = vector.broadcast %cst_50 : f32 to vector<16x128xf32>
    %92 = arith.mulf %91, %90 : vector<16x128xf32>
    %cst_51 = arith.constant 0.384397328 : f32
    %93 = vector.broadcast %cst_51 : f32 to vector<16x128xf32>
    %94 = arith.mulf %93, %87 : vector<16x128xf32>
    %95 = arith.addf %92, %94 : vector<16x128xf32>
    %96 = arith.mulf %27, %29 : vector<16x128xf32>
    %c1_i32_52 = arith.constant 1 : i32
    %97 = tpu.dynamic_rotate %96 by %c1_i32_52 dim 0 : vector<16x128xf32>, i32 -> vector<16x128xf32>
    %c15_i32_53 = arith.constant 15 : i32
    %98 = tpu.dynamic_rotate %96 by %c15_i32_53 dim 0 : vector<16x128xf32>, i32 -> vector<16x128xf32>
    %99 = arith.addf %97, %98 : vector<16x128xf32>
    %cst_54 = arith.constant 0.307801336 : f32
    %100 = vector.broadcast %cst_54 : f32 to vector<16x128xf32>
    %101 = arith.mulf %100, %99 : vector<16x128xf32>
    %cst_55 = arith.constant 0.384397328 : f32
    %102 = vector.broadcast %cst_55 : f32 to vector<16x128xf32>
    %103 = arith.mulf %102, %96 : vector<16x128xf32>
    %104 = arith.addf %101, %103 : vector<16x128xf32>
    %c3_i32_56 = arith.constant 3 : i32
    %105 = tpu.dynamic_rotate %104 by %c3_i32_56 dim 1 : vector<16x128xf32>, i32 -> vector<16x128xf32>
    %c125_i32_57 = arith.constant 125 : i32
    %106 = tpu.dynamic_rotate %104 by %c125_i32_57 dim 1 : vector<16x128xf32>, i32 -> vector<16x128xf32>
    %107 = arith.addf %105, %106 : vector<16x128xf32>
    %cst_58 = arith.constant 0.307801336 : f32
    %108 = vector.broadcast %cst_58 : f32 to vector<16x128xf32>
    %109 = arith.mulf %108, %107 : vector<16x128xf32>
    %cst_59 = arith.constant 0.384397328 : f32
    %110 = vector.broadcast %cst_59 : f32 to vector<16x128xf32>
    %111 = arith.mulf %110, %104 : vector<16x128xf32>
    %112 = arith.addf %109, %111 : vector<16x128xf32>
    %113 = arith.mulf %45, %45 : vector<16x128xf32>
    %114 = arith.mulf %61, %61 : vector<16x128xf32>
    %115 = arith.mulf %45, %61 : vector<16x128xf32>
    %cst_60 = arith.constant 2.000000e+00 : f32
    %116 = vector.broadcast %cst_60 : f32 to vector<16x128xf32>
    %117 = arith.mulf %116, %115 : vector<16x128xf32>
    %cst_61 = arith.constant 9.99999974E-5 : f32
    %118 = vector.broadcast %cst_61 : f32 to vector<16x128xf32>
    %119 = arith.addf %117, %118 : vector<16x128xf32>
    %120 = arith.subf %112, %115 : vector<16x128xf32>
    %cst_62 = arith.constant 2.000000e+00 : f32
    %121 = vector.broadcast %cst_62 : f32 to vector<16x128xf32>
    %122 = arith.mulf %121, %120 : vector<16x128xf32>
    %cst_63 = arith.constant 8.99999984E-4 : f32
    %123 = vector.broadcast %cst_63 : f32 to vector<16x128xf32>
    %124 = arith.addf %122, %123 : vector<16x128xf32>
    %125 = arith.mulf %119, %124 : vector<16x128xf32>
    %126 = arith.addf %113, %114 : vector<16x128xf32>
    %cst_64 = arith.constant 9.99999974E-5 : f32
    %127 = vector.broadcast %cst_64 : f32 to vector<16x128xf32>
    %128 = arith.addf %126, %127 : vector<16x128xf32>
    %129 = arith.subf %78, %113 : vector<16x128xf32>
    %130 = arith.subf %95, %114 : vector<16x128xf32>
    %131 = arith.addf %129, %130 : vector<16x128xf32>
    %cst_65 = arith.constant 8.99999984E-4 : f32
    %132 = vector.broadcast %cst_65 : f32 to vector<16x128xf32>
    %133 = arith.addf %131, %132 : vector<16x128xf32>
    %134 = arith.mulf %128, %133 : vector<16x128xf32>
    %135 = tpu.reciprocal %134 {approx = true} : vector<16x128xf32> -> vector<16x128xf32>
    %136 = arith.mulf %134, %135 : vector<16x128xf32>
    %cst_66 = arith.constant 2.000000e+00 : f32
    %137 = vector.broadcast %cst_66 : f32 to vector<16x128xf32>
    %138 = arith.subf %137, %136 : vector<16x128xf32>
    %139 = arith.mulf %135, %138 : vector<16x128xf32>
    %140 = arith.mulf %125, %139 : vector<16x128xf32>
    %cst_67 = arith.constant 1.000000e+00 : f32
    %141 = vector.broadcast %cst_67 : f32 to vector<16x128xf32>
    %142 = arith.subf %141, %140 : vector<16x128xf32>
    %cst_68 = arith.constant 0.000000e+00 : f32
    %cst_69 = arith.constant 1.000000e+00 : f32
    %143 = vector.broadcast %cst_68 : f32 to vector<16x128xf32>
    %144 = arith.maximumf %143, %142 : vector<16x128xf32>
    %145 = vector.broadcast %cst_69 : f32 to vector<16x128xf32>
    %146 = arith.minimumf %145, %144 : vector<16x128xf32>
    %cst_70 = arith.constant 5.000000e-01 : f32
    %147 = vector.broadcast %cst_70 : f32 to vector<16x128xf32>
    %148 = arith.mulf %146, %147 : vector<16x128xf32>
    %149 = tpu.iota {dimensions = array<i32: 0>} : vector<16x128xi32>
    %150 = tpu.iota {dimensions = array<i32: 1>} : vector<16x128xi32>
    %c8_i32 = arith.constant 8 : i32
    %151 = vector.broadcast %c8_i32 : i32 to vector<16x128xi32>
    %152 = arith.cmpi slt, %149, %151 : vector<16x128xi32>
    %c48_i32 = arith.constant 48 : i32
    %153 = vector.broadcast %c48_i32 : i32 to vector<16x128xi32>
    %154 = arith.cmpi slt, %150, %153 : vector<16x128xi32>
    %155 = arith.andi %152, %154 : vector<16x128xi1>
    %cst_71 = arith.constant 0.000000e+00 : f32
    %156 = vector.broadcast %cst_71 : f32 to vector<16x128xf32>
    %157 = arith.select %155, %148, %156 : vector<16x128xi1>, vector<16x128xf32>
    %158 = vector.shape_cast %157 : vector<16x128xf32> to vector<1x16x128xf32>
    %cst_72 = arith.constant dense<0.000000e+00> : vector<1xf32>
    %159 = vector.multi_reduction <add>, %158, %cst_72 [1, 2] : vector<1x16x128xf32> to vector<1xf32>
    %160 = vector.shape_cast %159 : vector<1xf32> to vector<1x1x1xf32>
    %161 = vector.extract %160[0, 0, 0] : f32 from vector<1x1x1xf32>
    %162 = vector.broadcast %161 : f32 to vector<1x1x1x1xf32>
    %c0_73 = arith.constant 0 : index
    %c0_74 = arith.constant 0 : index
    %c0_75 = arith.constant 0 : index
    %c0_76 = arith.constant 0 : index
    %163 = vector.load %arg8[%c0_73, %c0_74, %c0_75, %c0_76] : memref<1x1x1x1xf32, #tpu.memory_space<vmem>>, vector<1x1x1x1xf32>
    tpu.vector_store %arg8[%c0_73, %c0_74, %c0_75, %c0_76], %162 {strides = array<i32>} : memref<1x1x1x1xf32, #tpu.memory_space<vmem>>, vector<1x1x1x1xf32>,
    return
  }
  func.func @transform_0(%arg0: i32, %arg1: i32) -> (i32, i32, i32) {
    %c0_i32 = arith.constant 0 : i32
    %c0_i32_0 = arith.constant 0 : i32
    return %arg0, %arg1, %c0_i32 : i32, i32, i32
  }
  func.func @transform_1(%arg0: i32, %arg1: i32) -> (i32, i32, i32) {
    %c1_i32 = arith.constant 1 : i32
    %0 = arith.muli %arg1, %c1_i32 : i32
    %c1_i32_0 = arith.constant 1 : i32
    %1 = arith.subi %0, %c1_i32_0 : i32
    %c0_i32 = arith.constant 0 : i32
    %2 = arith.maxsi %1, %c0_i32 : i32
    %c0_i32_1 = arith.constant 0 : i32
    %c0_i32_2 = arith.constant 0 : i32
    return %arg0, %2, %c0_i32_1 : i32, i32, i32
  }
  func.func @transform_2(%arg0: i32, %arg1: i32) -> (i32, i32, i32) {
    %c1_i32 = arith.constant 1 : i32
    %0 = arith.addi %arg1, %c1_i32 : i32
    %c1_i32_0 = arith.constant 1 : i32
    %1 = arith.muli %0, %c1_i32_0 : i32
    %c1_i32_1 = arith.constant 1 : i32
    %2 = arith.minsi %1, %c1_i32_1 : i32
    %c0_i32 = arith.constant 0 : i32
    %c0_i32_2 = arith.constant 0 : i32
    return %arg0, %2, %c0_i32 : i32, i32, i32
  }
  func.func @transform_3(%arg0: i32, %arg1: i32) -> (i32, i32, i32) {
    %c0_i32 = arith.constant 0 : i32
    %c0_i32_0 = arith.constant 0 : i32
    return %arg0, %arg1, %c0_i32 : i32, i32, i32
  }
  func.func @transform_4(%arg0: i32, %arg1: i32) -> (i32, i32, i32) {
    %c1_i32 = arith.constant 1 : i32
    %0 = arith.muli %arg1, %c1_i32 : i32
    %c1_i32_0 = arith.constant 1 : i32
    %1 = arith.subi %0, %c1_i32_0 : i32
    %c0_i32 = arith.constant 0 : i32
    %2 = arith.maxsi %1, %c0_i32 : i32
    %c0_i32_1 = arith.constant 0 : i32
    %c0_i32_2 = arith.constant 0 : i32
    return %arg0, %2, %c0_i32_1 : i32, i32, i32
  }
  func.func @transform_5(%arg0: i32, %arg1: i32) -> (i32, i32, i32) {
    %c1_i32 = arith.constant 1 : i32
    %0 = arith.addi %arg1, %c1_i32 : i32
    %c1_i32_0 = arith.constant 1 : i32
    %1 = arith.muli %0, %c1_i32_0 : i32
    %c1_i32_1 = arith.constant 1 : i32
    %2 = arith.minsi %1, %c1_i32_1 : i32
    %c0_i32 = arith.constant 0 : i32
    %c0_i32_2 = arith.constant 0 : i32
    return %arg0, %2, %c0_i32 : i32, i32, i32
  }
  func.func @transform_6(%arg0: i32, %arg1: i32) -> (i32, i32, i32, i32) {
    %c0_i32 = arith.constant 0 : i32
    %c0_i32_0 = arith.constant 0 : i32
    %c0_i32_1 = arith.constant 0 : i32
    return %arg0, %arg1, %c0_i32, %c0_i32_0 : i32, i32, i32, i32
  }
}

</mosaic_0001>

<llo_original>
// kernel: tpu_custom_call.1
$region0: #{tpu_custom_call.1}
  #allocation0 [shape = 'u32[]', space=smem, size = 0x4, offset = 0x4, fixed_abs, tag = 'smem constant byte address 0x4 - core index']
  #allocation1 [shape = 'u32[144,128]{1,0:T(1,128)}', space=vmem, size = 0x12000, scoped, tag = 'internal scratch']
  %s0 = inlined_call_operand.hbm [shape: f32[2,16,48], index: 0, kind: input, shape index: {}]
  %s1 = inlined_call_operand.hbm [shape: f32[2,16,48], index: 1, kind: input, shape index: {}]
  %s2 = inlined_call_operand.hbm [shape: f32[2,16,48], index: 2, kind: input, shape index: {}]
  %s3 = inlined_call_operand.hbm [shape: f32[2,16,48], index: 3, kind: input, shape index: {}]
  %s4 = inlined_call_operand.hbm [shape: f32[2,16,48], index: 4, kind: input, shape index: {}]
  %s5 = inlined_call_operand.hbm [shape: f32[2,16,48], index: 5, kind: input, shape index: {}]
  %s6 = inlined_call_operand.vmem [shape: f32[2,2,1,1], index: 6, kind: output, shape index: {}]
  %s7 = sld [smem:[#allocation0]]
  $region81: #{tpu_custom_call.1} parent=0
    _
  %s9 = ssub.s32 1, %s7
  %s10 = scalar_select 0, %s9, %s7
  $region1: #{tpu_custom_call.1} parent=0
    #allocation2 [shape = 'u8[8192]{0}', space=vmem, size = 0x2000, scoped, tag = 'input window, operand 0']
    #allocation3 [shape = 's32[2]{0}', space=sflag, size = 0x8, scoped, tag = 'scoped memory for tpu_custom_call.1']
    #allocation4 [shape = 'u8[8192]{0}', space=vmem, size = 0x2000, scoped, tag = 'input window, operand 1']
    #allocation5 [shape = 's32[2]{0}', space=sflag, size = 0x8, scoped, tag = 'scoped memory for tpu_custom_call.1']
    #allocation6 [shape = 'u8[8192]{0}', space=vmem, size = 0x2000, scoped, tag = 'input window, operand 2']
    #allocation7 [shape = 'u8[8192]{0}', space=vmem, size = 0x2000, scoped, tag = 'input window, operand 3']
    #allocation8 [shape = 's32[2]{0}', space=sflag, size = 0x8, scoped, tag = 'scoped memory for tpu_custom_call.1']
    #allocation9 [shape = 'u8[8192]{0}', space=vmem, size = 0x2000, scoped, tag = 'input window, operand 4']
    #allocation10 [shape = 'u8[8192]{0}', space=vmem, size = 0x2000, scoped, tag = 'input window, operand 5']
    #allocation11 [shape = 's32[2]{0}', space=sflag, size = 0x8, scoped, tag = 'scoped memory for tpu_custom_call.1']
    %11 = vsyncpa [#allocation3], 0
    %s12 = scalar_lea.sflag [#allocation3], 1
    %13 = vsyncpa %s12, 0
    %14 = vsyncpa [#allocation5], 0
    %s15 = scalar_lea.sflag [#allocation5], 1
    %16 = vsyncpa %s15, 0
    %17 = vsyncpa [#allocation8], 0
    %s18 = scalar_lea.sflag [#allocation8], 1
    %19 = vsyncpa %s18, 0
    %20 = vsyncpa [#allocation11], 0
    %s21 = scalar_lea.sflag [#allocation11], 1
    %22 = vsyncpa %s21, 0
    loop: start=0, step=1, limit=6
    $region2: #{tpu_custom_call.1} parent=1 // loop_pre_header
      _
    $region3: #{tpu_custom_call.1} parent=1 // loop_header
      %s24 = sphi 0, %s28
      %p25 = scmp.ge.s32.totalorder %s24, 6
      %s31 = sphi 0, %s43
      %s32 = sphi 0, %s39
      %s33 = sphi 0, %s31
      %s34 = sphi 0, %s32
      %s35 = sphi 0, %s33
      %s36 = sphi 0, %s34
      %s48 = sphi 0, %s50
      %s51 = sphi 0, %s48
      %s52 = sphi 0, %s51
      %s68 = sphi 0, %s52
      %s82 = sphi 0, %s84
      %s85 = sphi 0, %s82
      %s86 = sphi 0, %s85
      %s102 = sphi 0, %s86
      %s116 = sphi 0, %s118
      %s119 = sphi 0, %s116
      %s120 = sphi 0, %s119
      %s136 = sphi 0, %s120
      %s144 = sphi 0, %s146
      %s147 = sphi 0, %s144
      %s148 = sphi 0, %s147
      %s164 = sphi 0, %s148
      %s178 = sphi 0, %s180
      %s181 = sphi 0, %s178
      %s182 = sphi 0, %s181
      %s198 = sphi 0, %s182
      %s212 = sphi 0, %s214
      %s215 = sphi 0, %s212
      %s216 = sphi 0, %s215
      %s232 = sphi 0, %s216
      %s240 = sphi 0, %s242
      %s243 = sphi 0, %s240
      %s244 = sphi 0, %s243
      %s260 = sphi 0, %s244
    $region4: #{tpu_custom_call.1} parent=1 // loop_header_branch
      %27 = sbr.rel (%p25) target = $region8
    $region5: #{tpu_custom_call.1} parent=1 // loop_body
      %s29 = ssub.s32 %s24, 1
      %s30 = ssub.s32 %s24, 2
      %s37 = sadd.s32 1, %s32
      %p38 = scmp.ge.s32.totalorder %s37, 2
      %s39 = scalar_select %p38, 0, %s37
      %s40 = sadd.s32 1, %s31
      %s41 = scalar_select %p38, %s40, %s31
      %p42 = scmp.ge.s32.totalorder %s41, 2
      %s43 = scalar_select %p42, 0, %s41
      %s44 = ssub.s32 %s31, %s43
      %s45 = ssub.s32 %s32, %s39
      %s46 = sor.u32 %s44, %s45
      %p47 = scmp.eq.s32.totalorder %s46, 0
      %s49 = sadd.s32 %s48, 1
      %s50 = scalar_select %p47, %s48, %s49
      %p53 = pneg %p47
      %p54 = scmp.eq.s32.totalorder %s24, 3
      %p55 = por %p53, %p54
      %p56 = scmp.ne.s32.totalorder %s48, %s51
      %p57 = scmp.eq.s32.totalorder %s24, 0
      %p58 = por %p56, %p57
      %p59 = scmp.ne.s32.totalorder %s48, %s51
      %p60 = scmp.eq.s32.totalorder %s29, 3
      %p61 = por %p59, %p60
      %p62 = scmp.ne.s32.totalorder %s51, %s52
      %p63 = scmp.eq.s32.totalorder %s29, 0
      %p64 = por %p62, %p63
      %p65 = scmp.ne.s32.totalorder %s51, %s52
      %p66 = scmp.eq.s32.totalorder %s30, 3
      %p67 = por %p65, %p66
      %p69 = scmp.ne.s32.totalorder %s52, %s68
      %p70 = scmp.eq.s32.totalorder %s30, 0
      %p71 = por %p69, %p70
      %s72 = ssub.s32 %s32, 1
      %p73 = scmp.gt.s32.totalorder %s72, 0
      %s74 = scalar_select %p73, %s72, 0
      %s75 = ssub.s32 %s39, 1
      %p76 = scmp.gt.s32.totalorder %s75, 0
      %s77 = scalar_select %p76, %s75, 0
      %s78 = ssub.s32 %s31, %s43
      %s79 = ssub.s32 %s74, %s77
      %s80 = sor.u32 %s78, %s79
      %p81 = scmp.eq.s32.totalorder %s80, 0
      %s83 = sadd.s32 %s82, 1
      %s84 = scalar_select %p81, %s82, %s83
      %p87 = pneg %p81
      %p88 = scmp.eq.s32.totalorder %s24, 3
      %p89 = por %p87, %p88
      %p90 = scmp.ne.s32.totalorder %s82, %s85
      %p91 = scmp.eq.s32.totalorder %s24, 0
      %p92 = por %p90, %p91
      %p93 = scmp.ne.s32.totalorder %s82, %s85
      %p94 = scmp.eq.s32.totalorder %s29, 3
      %p95 = por %p93, %p94
      %p96 = scmp.ne.s32.totalorder %s85, %s86
      %p97 = scmp.eq.s32.totalorder %s29, 0
      %p98 = por %p96, %p97
      %p99 = scmp.ne.s32.totalorder %s85, %s86
      %p100 = scmp.eq.s32.totalorder %s30, 3
      %p101 = por %p99, %p100
      %p103 = scmp.ne.s32.totalorder %s86, %s102
      %p104 = scmp.eq.s32.totalorder %s30, 0
      %p105 = por %p103, %p104
      %s106 = sadd.s32 %s32, 1
      %p107 = scmp.lt.s32.totalorder %s106, 1
      %s108 = scalar_select %p107, %s106, 1
      %s109 = sadd.s32 %s39, 1
      %p110 = scmp.lt.s32.totalorder %s109, 1
      %s111 = scalar_select %p110, %s109, 1
      %s112 = ssub.s32 %s31, %s43
      %s113 = ssub.s32 %s108, %s111
      %s114 = sor.u32 %s112, %s113
      %p115 = scmp.eq.s32.totalorder %s114, 0
      %s117 = sadd.s32 %s116, 1
      %s118 = scalar_select %p115, %s116, %s117
      %p121 = pneg %p115
      %p122 = scmp.eq.s32.totalorder %s24, 3
      %p123 = por %p121, %p122
      %p124 = scmp.ne.s32.totalorder %s116, %s119
      %p125 = scmp.eq.s32.totalorder %s24, 0
      %p126 = por %p124, %p125
      %p127 = scmp.ne.s32.totalorder %s116, %s119
      %p128 = scmp.eq.s32.totalorder %s29, 3
      %p129 = por %p127, %p128
      %p130 = scmp.ne.s32.totalorder %s119, %s120
      %p131 = scmp.eq.s32.totalorder %s29, 0
      %p132 = por %p130, %p131
      %p133 = scmp.ne.s32.totalorder %s119, %s120
      %p134 = scmp.eq.s32.totalorder %s30, 3
      %p135 = por %p133, %p134
      %p137 = scmp.ne.s32.totalorder %s120, %s136
      %p138 = scmp.eq.s32.totalorder %s30, 0
      %p139 = por %p137, %p138
      %s140 = ssub.s32 %s31, %s43
      %s141 = ssub.s32 %s32, %s39
      %s142 = sor.u32 %s140, %s141
      %p143 = scmp.eq.s32.totalorder %s142, 0
      %s145 = sadd.s32 %s144, 1
      %s146 = scalar_select %p143, %s144, %s145
      %p149 = pneg %p143
      %p150 = scmp.eq.s32.totalorder %s24, 3
      %p151 = por %p149, %p150
      %p152 = scmp.ne.s32.totalorder %s144, %s147
      %p153 = scmp.eq.s32.totalorder %s24, 0
      %p154 = por %p152, %p153
      %p155 = scmp.ne.s32.totalorder %s144, %s147
      %p156 = scmp.eq.s32.totalorder %s29, 3
      %p157 = por %p155, %p156
      %p158 = scmp.ne.s32.totalorder %s147, %s148
      %p159 = scmp.eq.s32.totalorder %s29, 0
      %p160 = por %p158, %p159
      %p161 = scmp.ne.s32.totalorder %s147, %s148
      %p162 = scmp.eq.s32.totalorder %s30, 3
      %p163 = por %p161, %p162
      %p165 = scmp.ne.s32.totalorder %s148, %s164
      %p166 = scmp.eq.s32.totalorder %s30, 0
      %p167 = por %p165, %p166
      %s168 = ssub.s32 %s32, 1
      %p169 = scmp.gt.s32.totalorder %s168, 0
      %s170 = scalar_select %p169, %s168, 0
      %s171 = ssub.s32 %s39, 1
      %p172 = scmp.gt.s32.totalorder %s171, 0
      %s173 = scalar_select %p172, %s171, 0
      %s174 = ssub.s32 %s31, %s43
      %s175 = ssub.s32 %s170, %s173
      %s176 = sor.u32 %s174, %s175
      %p177 = scmp.eq.s32.totalorder %s176, 0
      %s179 = sadd.s32 %s178, 1
      %s180 = scalar_select %p177, %s178, %s179
      %p183 = pneg %p177
      %p184 = scmp.eq.s32.totalorder %s24, 3
      %p185 = por %p183, %p184
      %p186 = scmp.ne.s32.totalorder %s178, %s181
      %p187 = scmp.eq.s32.totalorder %s24, 0
      %p188 = por %p186, %p187
      %p189 = scmp.ne.s32.totalorder %s178, %s181
      %p190 = scmp.eq.s32.totalorder %s29, 3
      %p191 = por %p189, %p190
      %p192 = scmp.ne.s32.totalorder %s181, %s182
      %p193 = scmp.eq.s32.totalorder %s29, 0
      %p194 = por %p192, %p193
      %p195 = scmp.ne.s32.totalorder %s181, %s182
      %p196 = scmp.eq.s32.totalorder %s30, 3
      %p197 = por %p195, %p196
      %p199 = scmp.ne.s32.totalorder %s182, %s198
      %p200 = scmp.eq.s32.totalorder %s30, 0
      %p201 = por %p199, %p200
      %s202 = sadd.s32 %s32, 1
      %p203 = scmp.lt.s32.totalorder %s202, 1
      %s204 = scalar_select %p203, %s202, 1
      %s205 = sadd.s32 %s39, 1
      %p206 = scmp.lt.s32.totalorder %s205, 1
      %s207 = scalar_select %p206, %s205, 1
      %s208 = ssub.s32 %s31, %s43
      %s209 = ssub.s32 %s204, %s207
      %s210 = sor.u32 %s208, %s209
      %p211 = scmp.eq.s32.totalorder %s210, 0
      %s213 = sadd.s32 %s212, 1
      %s214 = scalar_select %p211, %s212, %s213
      %p217 = pneg %p211
      %p218 = scmp.eq.s32.totalorder %s24, 3
      %p219 = por %p217, %p218
      %p220 = scmp.ne.s32.totalorder %s212, %s215
      %p221 = scmp.eq.s32.totalorder %s24, 0
      %p222 = por %p220, %p221
      %p223 = scmp.ne.s32.totalorder %s212, %s215
      %p224 = scmp.eq.s32.totalorder %s29, 3
      %p225 = por %p223, %p224
      %p226 = scmp.ne.s32.totalorder %s215, %s216
      %p227 = scmp.eq.s32.totalorder %s29, 0
      %p228 = por %p226, %p227
      %p229 = scmp.ne.s32.totalorder %s215, %s216
      %p230 = scmp.eq.s32.totalorder %s30, 3
      %p231 = por %p229, %p230
      %p233 = scmp.ne.s32.totalorder %s216, %s232
      %p234 = scmp.eq.s32.totalorder %s30, 0
      %p235 = por %p233, %p234
      %s236 = ssub.s32 %s31, %s43
      %s237 = ssub.s32 %s32, %s39
      %s238 = sor.u32 %s236, %s237
      %p239 = scmp.eq.s32.totalorder %s238, 0
      %s241 = sadd.s32 %s240, 1
      %s242 = scalar_select %p239, %s240, %s241
      %p245 = pneg %p239
      %p246 = scmp.eq.s32.totalorder %s24, 3
      %p247 = por %p245, %p246
      %p248 = scmp.ne.s32.totalorder %s240, %s243
      %p249 = scmp.eq.s32.totalorder %s24, 0
      %p250 = por %p248, %p249
      %p251 = scmp.ne.s32.totalorder %s240, %s243
      %p252 = scmp.eq.s32.totalorder %s29, 3
      %p253 = por %p251, %p252
      %p254 = scmp.ne.s32.totalorder %s243, %s244
      %p255 = scmp.eq.s32.totalorder %s29, 0
      %p256 = por %p254, %p255
      %p257 = scmp.ne.s32.totalorder %s243, %s244
      %p258 = scmp.eq.s32.totalorder %s30, 3
      %p259 = por %p257, %p258
      %p261 = scmp.ne.s32.totalorder %s244, %s260
      %p262 = scmp.eq.s32.totalorder %s30, 0
      %p263 = por %p261, %p262
      %p264 = scmp.le.s32.totalorder 1, %s24
      %p265 = scmp.lt.s32.totalorder %s24, 5
      %p266 = pnand %p264, %p265
      %p267 = pneg %p266
      // Predicated region
      $region9: #{tpu_custom_call.1} parent=5 // pred_check
        _
      $region10: #{tpu_custom_call.1} parent=5 // pred_check_branch
        %269 = sbr.rel (%p266) target = $region12
      $region11: #{tpu_custom_call.1} parent=5 // pred_region
        %s270 = ssub.s32 %s24, 1
      $region12: #{tpu_custom_call.1} parent=5 // pred_fallthru
        _
      %p271 = scmp.lt.s32.totalorder %s24, 4
      // Predicated region
      $region13: #{tpu_custom_call.1} parent=5 // pred_check
        %p272 = pneg %p271
      $region14: #{tpu_custom_call.1} parent=5 // pred_check_branch
        %274 = sbr.rel (%p272) target = $region16
      $region15: #{tpu_custom_call.1} parent=5 // pred_region
        // Predicated region
        $region17: #{tpu_custom_call.1} parent=15 // pred_check
          %p275 = pneg %p58
        $region18: #{tpu_custom_call.1} parent=15 // pred_check_branch
          %277 = sbr.rel (%p275) target = $region20
        $region19: #{tpu_custom_call.1} parent=15 // pred_region
          %s278 = sand.u32 %s48, 1
          %s279 = scalar_lea.sflag [#allocation3], %s278
          %s280 = sand.u32 %s48, 1
          %s281 = smul.addr %s280, 8
          %s282 = scalar_lea.vmem [#allocation2], %s281
          %s284 = ssub.s32 128, 128
          %285 = vsyncadd %s279, %s284
          %s286 = smul.addr %s31, 2
          %s287 = sadd.s32 %s32, %s286
          %s288 = smul.addr %s287, 128
          %s289 = scalar_lea.hbm %s0, %s288
          %s291 = sshll.u32 %s282, 4
          %s292 = int_to_ptr.vmem [resolvable:$true] %s291
          %294 = dma.hbm_to_vmem [thread:$0]  %s289, 128, %s292, %s279
        $region20: #{tpu_custom_call.1} parent=15 // pred_fallthru
          _
        // Predicated region
        $region21: #{tpu_custom_call.1} parent=15 // pred_check
          %p295 = pneg %p92
        $region22: #{tpu_custom_call.1} parent=15 // pred_check_branch
          %297 = sbr.rel (%p295) target = $region24
        $region23: #{tpu_custom_call.1} parent=15 // pred_region
          %s298 = sand.u32 %s24, 1
          %s299 = scalar_lea.sflag [#allocation5], %s298
          %s300 = sand.u32 %s82, 1
          %s301 = smul.addr %s300, 8
          %s302 = scalar_lea.vmem [#allocation4], %s301
          %s303 = ssub.s32 %s32, 1
          %p304 = scmp.gt.s32.totalorder %s303, 0
          %s305 = scalar_select %p304, %s303, 0
          %s307 = ssub.s32 128, 128
          %308 = vsyncadd %s299, %s307
          %s309 = smul.addr %s31, 2
          %s310 = sadd.s32 %s305, %s309
          %s311 = smul.addr %s310, 128
          %s312 = scalar_lea.hbm %s1, %s311
          %s314 = sshll.u32 %s302, 4
          %s315 = int_to_ptr.vmem [resolvable:$true] %s314
          %317 = dma.hbm_to_vmem [thread:$0]  %s312, 128, %s315, %s299
        $region24: #{tpu_custom_call.1} parent=15 // pred_fallthru
          _
        // Predicated region
        $region25: #{tpu_custom_call.1} parent=15 // pred_check
          %p318 = pneg %p126
        $region26: #{tpu_custom_call.1} parent=15 // pred_check_branch
          %320 = sbr.rel (%p318) target = $region28
        $region27: #{tpu_custom_call.1} parent=15 // pred_region
          %s321 = sand.u32 %s24, 1
          %s322 = scalar_lea.sflag [#allocation5], %s321
          %s323 = sand.u32 %s116, 1
          %s324 = smul.addr %s323, 8
          %s325 = scalar_lea.vmem [#allocation6], %s324
          %s326 = sadd.s32 %s32, 1
          %p327 = scmp.lt.s32.totalorder %s326, 1
          %s328 = scalar_select %p327, %s326, 1
          %s330 = ssub.s32 128, 128
          %331 = vsyncadd %s322, %s330
          %s332 = smul.addr %s31, 2
          %s333 = sadd.s32 %s328, %s332
          %s334 = smul.addr %s333, 128
          %s335 = scalar_lea.hbm %s2, %s334
          %s337 = sshll.u32 %s325, 4
          %s338 = int_to_ptr.vmem [resolvable:$true] %s337
          %340 = dma.hbm_to_vmem [thread:$0]  %s335, 128, %s338, %s322
        $region28: #{tpu_custom_call.1} parent=15 // pred_fallthru
          _
        // Predicated region
        $region29: #{tpu_custom_call.1} parent=15 // pred_check
          %p341 = pneg %p154
        $region30: #{tpu_custom_call.1} parent=15 // pred_check_branch
          %343 = sbr.rel (%p341) target = $region32
        $region31: #{tpu_custom_call.1} parent=15 // pred_region
          %s344 = sand.u32 %s24, 1
          %s345 = scalar_lea.sflag [#allocation8], %s344
          %s346 = sand.u32 %s144, 1
          %s347 = smul.addr %s346, 8
          %s348 = scalar_lea.vmem [#allocation7], %s347
          %s350 = ssub.s32 128, 128
          %351 = vsyncadd %s345, %s350
          %s352 = smul.addr %s31, 2
          %s353 = sadd.s32 %s32, %s352
          %s354 = smul.addr %s353, 128
          %s355 = scalar_lea.hbm %s3, %s354
          %s357 = sshll.u32 %s348, 4
          %s358 = int_to_ptr.vmem [resolvable:$true] %s357
          %360 = dma.hbm_to_vmem [thread:$0]  %s355, 128, %s358, %s345
        $region32: #{tpu_custom_call.1} parent=15 // pred_fallthru
          _
        // Predicated region
        $region33: #{tpu_custom_call.1} parent=15 // pred_check
          %p361 = pneg %p188
        $region34: #{tpu_custom_call.1} parent=15 // pred_check_branch
          %363 = sbr.rel (%p361) target = $region36
        $region35: #{tpu_custom_call.1} parent=15 // pred_region
          %s364 = sand.u32 %s24, 1
          %s365 = scalar_lea.sflag [#allocation8], %s364
          %s366 = sand.u32 %s178, 1
          %s367 = smul.addr %s366, 8
          %s368 = scalar_lea.vmem [#allocation9], %s367
          %s369 = ssub.s32 %s32, 1
          %p370 = scmp.gt.s32.totalorder %s369, 0
          %s371 = scalar_select %p370, %s369, 0
          %s373 = ssub.s32 128, 128
          %374 = vsyncadd %s365, %s373
          %s375 = smul.addr %s31, 2
          %s376 = sadd.s32 %s371, %s375
          %s377 = smul.addr %s376, 128
          %s378 = scalar_lea.hbm %s4, %s377
          %s380 = sshll.u32 %s368, 4
          %s381 = int_to_ptr.vmem [resolvable:$true] %s380
          %383 = dma.hbm_to_vmem [thread:$0]  %s378, 128, %s381, %s365
        $region36: #{tpu_custom_call.1} parent=15 // pred_fallthru
          _
        // Predicated region
        $region37: #{tpu_custom_call.1} parent=15 // pred_check
          %p384 = pneg %p222
        $region38: #{tpu_custom_call.1} parent=15 // pred_check_branch
          %386 = sbr.rel (%p384) target = $region40
        $region39: #{tpu_custom_call.1} parent=15 // pred_region
          %s387 = sand.u32 %s212, 1
          %s388 = scalar_lea.sflag [#allocation11], %s387
          %s389 = sand.u32 %s212, 1
          %s390 = smul.addr %s389, 8
          %s391 = scalar_lea.vmem [#allocation10], %s390
          %s392 = sadd.s32 %s32, 1
          %p393 = scmp.lt.s32.totalorder %s392, 1
          %s394 = scalar_select %p393, %s392, 1
          %s396 = ssub.s32 128, 128
          %397 = vsyncadd %s388, %s396
          %s398 = smul.addr %s31, 2
          %s399 = sadd.s32 %s394, %s398
          %s400 = smul.addr %s399, 128
          %s401 = scalar_lea.hbm %s5, %s400
          %s403 = sshll.u32 %s391, 4
          %s404 = int_to_ptr.vmem [resolvable:$true] %s403
          %406 = dma.hbm_to_vmem [thread:$0]  %s401, 128, %s404, %s388
        $region40: #{tpu_custom_call.1} parent=15 // pred_fallthru
          _
      $region16: #{tpu_custom_call.1} parent=5 // pred_fallthru
        _
      %p407 = scmp.le.s32.totalorder 1, %s24
      %p408 = scmp.lt.s32.totalorder %s24, 5
      %p409 = pnand %p407, %p408
      %p410 = pneg %p409
      // Predicated region
      $region41: #{tpu_custom_call.1} parent=5 // pred_check
        _
      $region42: #{tpu_custom_call.1} parent=5 // pred_check_branch
        %412 = sbr.rel (%p409) target = $region44
      $region43: #{tpu_custom_call.1} parent=5 // pred_region
        %s413 = ssub.s32 %s24, 1
        %s414 = sand.u32 %s51, 1
        %s415 = scalar_lea.sflag [#allocation3], %s414
        %s416 = sand.u32 %s51, 1
        %s417 = smul.addr %s416, 8
        %s418 = scalar_lea.vmem [#allocation2], %s417
        // Predicated region
        $region45: #{tpu_custom_call.1} parent=43 // pred_check
          %p419 = pneg %p64
        $region46: #{tpu_custom_call.1} parent=43 // pred_check_branch
          %421 = sbr.rel (%p419) target = $region48
        $region47: #{tpu_custom_call.1} parent=43 // pred_region
          %422 = dma.done %s415, 128
        $region48: #{tpu_custom_call.1} parent=43 // pred_fallthru
          _
        %s423 = sand.u32 %s29, 1
        %s424 = scalar_lea.sflag [#allocation5], %s423
        %s425 = sand.u32 %s85, 1
        %s426 = smul.addr %s425, 8
        %s427 = scalar_lea.vmem [#allocation4], %s426
        // Predicated region
        $region49: #{tpu_custom_call.1} parent=43 // pred_check
          %p428 = pneg %p98
        $region50: #{tpu_custom_call.1} parent=43 // pred_check_branch
          %430 = sbr.rel (%p428) target = $region52
        $region51: #{tpu_custom_call.1} parent=43 // pred_region
          %431 = dma.done %s424, 128
        $region52: #{tpu_custom_call.1} parent=43 // pred_fallthru
          _
        %s432 = sand.u32 %s29, 1
        %s433 = scalar_lea.sflag [#allocation5], %s432
        %s434 = sand.u32 %s119, 1
        %s435 = smul.addr %s434, 8
        %s436 = scalar_lea.vmem [#allocation6], %s435
        // Predicated region
        $region53: #{tpu_custom_call.1} parent=43 // pred_check
          %p437 = pneg %p132
        $region54: #{tpu_custom_call.1} parent=43 // pred_check_branch
          %439 = sbr.rel (%p437) target = $region56
        $region55: #{tpu_custom_call.1} parent=43 // pred_region
          %440 = dma.done %s433, 128
        $region56: #{tpu_custom_call.1} parent=43 // pred_fallthru
          _
        %s441 = sand.u32 %s29, 1
        %s442 = scalar_lea.sflag [#allocation8], %s441
        %s443 = sand.u32 %s147, 1
        %s444 = smul.addr %s443, 8
        %s445 = scalar_lea.vmem [#allocation7], %s444
        // Predicated region
        $region57: #{tpu_custom_call.1} parent=43 // pred_check
          %p446 = pneg %p160
        $region58: #{tpu_custom_call.1} parent=43 // pred_check_branch
          %448 = sbr.rel (%p446) target = $region60
        $region59: #{tpu_custom_call.1} parent=43 // pred_region
          %449 = dma.done %s442, 128
        $region60: #{tpu_custom_call.1} parent=43 // pred_fallthru
          _
        %s450 = sand.u32 %s29, 1
        %s451 = scalar_lea.sflag [#allocation8], %s450
        %s452 = sand.u32 %s181, 1
        %s453 = smul.addr %s452, 8
        %s454 = scalar_lea.vmem [#allocation9], %s453
        // Predicated region
        $region61: #{tpu_custom_call.1} parent=43 // pred_check
          %p455 = pneg %p194
        $region62: #{tpu_custom_call.1} parent=43 // pred_check_branch
          %457 = sbr.rel (%p455) target = $region64
        $region63: #{tpu_custom_call.1} parent=43 // pred_region
          %458 = dma.done %s451, 128
        $region64: #{tpu_custom_call.1} parent=43 // pred_fallthru
          _
        %s459 = sand.u32 %s215, 1
        %s460 = scalar_lea.sflag [#allocation11], %s459
        %s461 = sand.u32 %s215, 1
        %s462 = smul.addr %s461, 8
        %s463 = scalar_lea.vmem [#allocation10], %s462
        // Predicated region
        $region65: #{tpu_custom_call.1} parent=43 // pred_check
          %p464 = pneg %p228
        $region66: #{tpu_custom_call.1} parent=43 // pred_check_branch
          %466 = sbr.rel (%p464) target = $region68
        $region67: #{tpu_custom_call.1} parent=43 // pred_region
          %467 = dma.done %s460, 128
        $region68: #{tpu_custom_call.1} parent=43 // pred_fallthru
          _
        %s468 = sand.u32 %s51, 1
        %s469 = scalar_lea.sflag [#allocation3], %s468
        %s470 = sand.u32 %s51, 1
        %s471 = smul.addr %s470, 8
        %s472 = scalar_lea.vmem [#allocation2], %s471
        %p473 = pneg %p64
        %p474 = pneg %p61
        %s475 = sand.u32 %s29, 1
        %s476 = scalar_lea.sflag [#allocation5], %s475
        %s477 = sand.u32 %s85, 1
        %s478 = smul.addr %s477, 8
        %s479 = scalar_lea.vmem [#allocation4], %s478
        %p480 = pneg %p98
        %p481 = pneg %p95
        %s482 = sand.u32 %s29, 1
        %s483 = scalar_lea.sflag [#allocation5], %s482
        %s484 = sand.u32 %s119, 1
        %s485 = smul.addr %s484, 8
        %s486 = scalar_lea.vmem [#allocation6], %s485
        %p487 = pneg %p132
        %p488 = pneg %p129
        %s489 = sand.u32 %s29, 1
        %s490 = scalar_lea.sflag [#allocation8], %s489
        %s491 = sand.u32 %s147, 1
        %s492 = smul.addr %s491, 8
        %s493 = scalar_lea.vmem [#allocation7], %s492
        %p494 = pneg %p160
        %p495 = pneg %p157
        %s496 = sand.u32 %s29, 1
        %s497 = scalar_lea.sflag [#allocation8], %s496
        %s498 = sand.u32 %s181, 1
        %s499 = smul.addr %s498, 8
        %s500 = scalar_lea.vmem [#allocation9], %s499
        %p501 = pneg %p194
        %p502 = pneg %p191
        %s503 = sand.u32 %s215, 1
        %s504 = scalar_lea.sflag [#allocation11], %s503
        %s505 = sand.u32 %s215, 1
        %s506 = smul.addr %s505, 8
        %s507 = scalar_lea.vmem [#allocation10], %s506
        %p508 = pneg %p228
        %p509 = pneg %p225
        %p510 = pneg %p256
        %p511 = pneg %p253
        %p512 = scmp.lt.s32.totalorder %s33, 1
        %s513 = scalar_select %p512, %s33, 1
        %p514 = scmp.lt.s32.totalorder %s34, 1
        %s515 = scalar_select %p514, %s34, 1
        %s516 = smul.addr %s513, 2
        %s517 = sadd.s32 %s515, %s516
        %s518 = scalar_lea.vmem %s6, %s517
        %s519 = ssub.s32 %s34, 1
        %p520 = scmp.gt.s32.totalorder %s519, 0
        %s521 = scalar_select %p520, %s519, 0
        %s522 = sadd.s32 %s34, 1
        %p523 = scmp.lt.s32.totalorder %s522, 1
        %s524 = scalar_select %p523, %s522, 1
        %s525 = ssub.s32 %s34, 1
        %p526 = scmp.gt.s32.totalorder %s525, 0
        %s527 = scalar_select %p526, %s525, 0
        %s528 = sadd.s32 %s34, 1
        %p529 = scmp.lt.s32.totalorder %s528, 1
        %s530 = scalar_select %p529, %s528, 1
        %p531 = scmp.lt.s32.totalorder %s33, 1
        %s532 = scalar_select %p531, %s33, 1
        %p533 = scmp.lt.s32.totalorder %s34, 1
        %s534 = scalar_select %p533, %s34, 1
        %s535 = smul.addr %s532, 2
        %s536 = sadd.s32 %s534, %s535
        %s537 = scalar_lea.vmem %s6, %s536
        %v538 = vld [vmem:[%s418] sm:$0xff]
        %v539 = vld [vmem:[%s445] sm:$0xff]
        %p540 = scmp.gt.s32.totalorder %s34, 0
        %v541 = vld [vmem:[%s427 + $0x7] sm:$0x1]
        %s542 = scalar_select %p540, 1, 0
        %v543 = vstv %s542
        %vm544 = vcmp.eq.s32.totalorder %v543, 1
        %v545 = vsel %vm544, %v541, 0.0
        %v546 = vld [vmem:[%s454 + $0x7] sm:$0x1]
        %v547 = vsel %vm544, %v546, 0.0
        %p548 = scmp.lt.s32.totalorder %s34, 1
        %v549 = vld [vmem:[%s436] sm:$0x1]
        %s550 = scalar_select %p548, 1, 0
        %v551 = vstv %s550
        %vm552 = vcmp.eq.s32.totalorder %v551, 1
        %v553 = vsel %vm552, %v549, 0.0
        %v554 = vld [vmem:[%s463] sm:$0x1]
        %v555 = vsel %vm552, %v554, 0.0
        %v557 = vrot.slane %v545, 1
        %vm559 = vcmask 1040384
        %v560 = vsel %vm559, %v553, 0.0
        %vm561 = vcmask 1046528
        %v562 = vsel %vm561, %v560, %v557
        %vm563 = vcmask 392192
        %v564 = vsel %vm563, %v538, 0.0
        %v565 = vsel %vm563, %v562, 0.0
        %v567 = vrot.slane %v547, 1
        %v569 = vsel %vm559, %v555, 0.0
        %v570 = vsel %vm561, %v569, %v567
        %v571 = vsel %vm563, %v539, 0.0
        %v572 = vsel %vm563, %v570, 0.0
        %v573 = vrot.slane %v564, 7
        %v574 = vrot.slane %v565, 7
        %v575 = vlaneseq
        %v576 = vshrl.u32 %v575, 7
        %vm577 = vcmp.lt.s32.totalorder %v576, 1
        %v578 = vsel %vm577, %v573, %v574
        %v579 = vsel %vm577, %v574, %v573
        %v580 = vrot.slane %v564, 1
        %v581 = vrot.slane %v565, 1
        %vm582 = vcmp.lt.s32.totalorder %v576, 7
        %v583 = vsel %vm582, %v580, %v581
        %v584 = vsel %vm582, %v581, %v580
        %v585 = vadd.f32 %v579, %v583
        %v586 = vadd.f32 %v578, %v584
        %v587 = vmul.f32 %v585, 0.30780134
        %v588 = vmul.f32 %v586, 0.30780134
        %v589 = vmul.f32 %v564, 0.38439733
        %v590 = vmul.f32 %v565, 0.38439733
        %v591 = vadd.f32 %v587, %v589
        %v592 = vadd.f32 %v588, %v590
        %593 = vrot.lane.b32.xlu0 %v591, 3
        %v594 = vpop.permute.xlu0 %593
        %595 = vrot.lane.b32.xlu0 %v592, 3
        %v596 = vpop.permute.xlu0 %595
        %597 = vrot.lane.b32.xlu0 %v591, 125
        %v598 = vpop.permute.xlu0 %597
        %599 = vrot.lane.b32.xlu0 %v592, 125
        %v600 = vpop.permute.xlu0 %599
        %v601 = vadd.f32 %v594, %v598
        %v602 = vadd.f32 %v596, %v600
        %v603 = vmul.f32 %v601, 0.30780134
        %v604 = vmul.f32 %v602, 0.30780134
        %v605 = vmul.f32 %v591, 0.38439733
        %v606 = vmul.f32 %v592, 0.38439733
        %v607 = vadd.f32 %v603, %v605
        %v608 = vadd.f32 %v604, %v606
        %v609 = vrot.slane %v571, 7
        %v610 = vrot.slane %v572, 7
        %v611 = vsel %vm577, %v609, %v610
        %v612 = vsel %vm577, %v610, %v609
        %v613 = vrot.slane %v571, 1
        %v614 = vrot.slane %v572, 1
        %v615 = vsel %vm582, %v613, %v614
        %v616 = vsel %vm582, %v614, %v613
        %v617 = vadd.f32 %v612, %v615
        %v618 = vadd.f32 %v611, %v616
        %v619 = vmul.f32 %v617, 0.30780134
        %v620 = vmul.f32 %v618, 0.30780134
        %v621 = vmul.f32 %v571, 0.38439733
        %v622 = vmul.f32 %v572, 0.38439733
        %v623 = vadd.f32 %v619, %v621
        %v624 = vadd.f32 %v620, %v622
        %625 = vrot.lane.b32.xlu0 %v623, 3
        %v626 = vpop.permute.xlu0 %625
        %627 = vrot.lane.b32.xlu0 %v624, 3
        %v628 = vpop.permute.xlu0 %627
        %629 = vrot.lane.b32.xlu0 %v623, 125
        %v630 = vpop.permute.xlu0 %629
        %631 = vrot.lane.b32.xlu0 %v624, 125
        %v632 = vpop.permute.xlu0 %631
        %v633 = vadd.f32 %v626, %v630
        %v634 = vadd.f32 %v628, %v632
        %v635 = vmul.f32 %v633, 0.30780134
        %v636 = vmul.f32 %v634, 0.30780134
        %v637 = vmul.f32 %v623, 0.38439733
        %v638 = vmul.f32 %v624, 0.38439733
        %v639 = vadd.f32 %v635, %v637
        %v640 = vadd.f32 %v636, %v638
        %v641 = vmul.f32 %v564, %v564
        %v642 = vmul.f32 %v565, %v565
        %v643 = vrot.slane %v641, 7
        %v644 = vrot.slane %v642, 7
        %v645 = vsel %vm577, %v643, %v644
        %v646 = vsel %vm577, %v644, %v643
        %v647 = vrot.slane %v641, 1
        %v648 = vrot.slane %v642, 1
        %v649 = vsel %vm582, %v647, %v648
        %v650 = vsel %vm582, %v648, %v647
        %v651 = vadd.f32 %v646, %v649
        %v652 = vadd.f32 %v645, %v650
        %v653 = vmul.f32 %v651, 0.30780134
        %v654 = vmul.f32 %v652, 0.30780134
        %v655 = vmul.f32 %v641, 0.38439733
        %v656 = vmul.f32 %v642, 0.38439733
        %v657 = vadd.f32 %v653, %v655
        %v658 = vadd.f32 %v654, %v656
        %659 = vrot.lane.b32.xlu0 %v657, 3
        %v660 = vpop.permute.xlu0 %659
        %661 = vrot.lane.b32.xlu0 %v658, 3
        %v662 = vpop.permute.xlu0 %661
        %663 = vrot.lane.b32.xlu0 %v657, 125
        %v664 = vpop.permute.xlu0 %663
        %665 = vrot.lane.b32.xlu0 %v658, 125
        %v666 = vpop.permute.xlu0 %665
        %v667 = vadd.f32 %v660, %v664
        %v668 = vadd.f32 %v662, %v666
        %v669 = vmul.f32 %v667, 0.30780134
        %v670 = vmul.f32 %v668, 0.30780134
        %v671 = vmul.f32 %v657, 0.38439733
        %v672 = vmul.f32 %v658, 0.38439733
        %v673 = vadd.f32 %v669, %v671
        %v674 = vadd.f32 %v670, %v672
        %v675 = vmul.f32 %v571, %v571
        %v676 = vmul.f32 %v572, %v572
        %v677 = vrot.slane %v675, 7
        %v678 = vrot.slane %v676, 7
        %v679 = vsel %vm577, %v677, %v678
        %v680 = vsel %vm577, %v678, %v677
        %v681 = vrot.slane %v675, 1
        %v682 = vrot.slane %v676, 1
        %v683 = vsel %vm582, %v681, %v682
        %v684 = vsel %vm582, %v682, %v681
        %v685 = vadd.f32 %v680, %v683
        %v686 = vadd.f32 %v679, %v684
        %v687 = vmul.f32 %v685, 0.30780134
        %v688 = vmul.f32 %v686, 0.30780134
        %v689 = vmul.f32 %v675, 0.38439733
        %v690 = vmul.f32 %v676, 0.38439733
        %v691 = vadd.f32 %v687, %v689
        %v692 = vadd.f32 %v688, %v690
        %693 = vrot.lane.b32.xlu0 %v691, 3
        %v694 = vpop.permute.xlu0 %693
        %695 = vrot.lane.b32.xlu0 %v692, 3
        %v696 = vpop.permute.xlu0 %695
        %697 = vrot.lane.b32.xlu0 %v691, 125
        %v698 = vpop.permute.xlu0 %697
        %699 = vrot.lane.b32.xlu0 %v692, 125
        %v700 = vpop.permute.xlu0 %699
        %v701 = vadd.f32 %v694, %v698
        %v702 = vadd.f32 %v696, %v700
        %v703 = vmul.f32 %v701, 0.30780134
        %v704 = vmul.f32 %v702, 0.30780134
        %v705 = vmul.f32 %v691, 0.38439733
        %v706 = vmul.f32 %v692, 0.38439733
        %v707 = vadd.f32 %v703, %v705
        %v708 = vadd.f32 %v704, %v706
        %v709 = vmul.f32 %v564, %v571
        %v710 = vmul.f32 %v565, %v572
        %v711 = vrot.slane %v709, 7
        %v712 = vrot.slane %v710, 7
        %v713 = vsel %vm577, %v711, %v712
        %v714 = vsel %vm577, %v712, %v711
        %v715 = vrot.slane %v709, 1
        %v716 = vrot.slane %v710, 1
        %v717 = vsel %vm582, %v715, %v716
        %v718 = vsel %vm582, %v716, %v715
        %v719 = vadd.f32 %v714, %v717
        %v720 = vadd.f32 %v713, %v718
        %v721 = vmul.f32 %v719, 0.30780134
        %v722 = vmul.f32 %v720, 0.30780134
        %v723 = vmul.f32 %v709, 0.38439733
        %v724 = vmul.f32 %v710, 0.38439733
        %v725 = vadd.f32 %v721, %v723
        %v726 = vadd.f32 %v722, %v724
        %727 = vrot.lane.b32.xlu0 %v725, 3
        %v728 = vpop.permute.xlu0 %727
        %729 = vrot.lane.b32.xlu0 %v726, 3
        %v730 = vpop.permute.xlu0 %729
        %731 = vrot.lane.b32.xlu0 %v725, 125
        %v732 = vpop.permute.xlu0 %731
        %733 = vrot.lane.b32.xlu0 %v726, 125
        %v734 = vpop.permute.xlu0 %733
        %v735 = vadd.f32 %v728, %v732
        %v736 = vadd.f32 %v730, %v734
        %v737 = vmul.f32 %v735, 0.30780134
        %v738 = vmul.f32 %v736, 0.30780134
        %v739 = vmul.f32 %v725, 0.38439733
        %v740 = vmul.f32 %v726, 0.38439733
        %v741 = vadd.f32 %v737, %v739
        %v742 = vadd.f32 %v738, %v740
        %v743 = vmul.f32 %v607, %v607
        %v744 = vmul.f32 %v608, %v608
        %v745 = vmul.f32 %v639, %v639
        %v746 = vmul.f32 %v640, %v640
        %v747 = vmul.f32 %v607, %v639
        %v748 = vmul.f32 %v608, %v640
        %v749 = vmul.f32 %v747, 2.0
        %v750 = vmul.f32 %v748, 2.0
        %v751 = vadd.f32 %v749, 0.0001
        %v752 = vadd.f32 %v750, 0.0001
        %v753 = vsub.f32 %v741, %v747
        %v754 = vsub.f32 %v742, %v748
        %v755 = vmul.f32 %v753, 2.0
        %v756 = vmul.f32 %v754, 2.0
        %v757 = vadd.f32 %v755, 0.0009
        %v758 = vadd.f32 %v756, 0.0009
        %v759 = vmul.f32 %v751, %v757
        %v760 = vmul.f32 %v752, %v758
        %v761 = vadd.f32 %v743, %v745
        %v762 = vadd.f32 %v744, %v746
        %v763 = vadd.f32 %v761, 0.0001
        %v764 = vadd.f32 %v762, 0.0001
        %v765 = vsub.f32 %v673, %v743
        %v766 = vsub.f32 %v674, %v744
        %v767 = vsub.f32 %v707, %v745
        %v768 = vsub.f32 %v708, %v746
        %v769 = vadd.f32 %v765, %v767
        %v770 = vadd.f32 %v766, %v768
        %v771 = vadd.f32 %v769, 0.0009
        %v772 = vadd.f32 %v770, 0.0009
        %v773 = vmul.f32 %v763, %v771
        %v774 = vmul.f32 %v764, %v772
        %v775 = vrcp.pop %v773
        %v776 = vrcp.pop %v774
        %v777 = vmul.f32 %v773, %v775
        %v778 = vmul.f32 %v774, %v776
        %v779 = vsub.f32 2.0, %v777
        %v780 = vsub.f32 2.0, %v778
        %v781 = vmul.f32 %v775, %v779
        %v782 = vmul.f32 %v776, %v780
        %v783 = vmul.f32 %v759, %v781
        %v784 = vmul.f32 %v760, %v782
        %v785 = vsub.f32 1.0, %v783
        %v786 = vsub.f32 1.0, %v784
        %v787 = vmax.f32 %v785, 0.0
        %v788 = vmax.f32 %v786, 0.0
        %v789 = vmin.f32 %v787, 1.0
        %v790 = vmin.f32 %v788, 1.0
        %v791 = vmul.f32 %v789, 0.5
        %v792 = vmul.f32 %v790, 0.5
        %v793 = vadd.s32 %v576, 8
        %v794 = vlaneseq
        %v795 = vand.u32 %v794, 127
        %vm796 = vcmp.lt.s32.totalorder %v576, 8
        %vm797 = vcmp.lt.s32.totalorder %v793, 8
        %vm798 = vcmp.lt.s32.totalorder %v795, 48
        %vm799 = vmand %vm796, %vm798
        %vm800 = vmand %vm797, %vm798
        %v801 = vsel %vm799, %v791, 0.0
        %v802 = vsel %vm800, %v792, 0.0
        %v803 = vadd.f32 %v801, %v802
        %804 = vadd.xlane.f32.xlu0 %v803
        %v805 = vpop.xlane.xlu0 %804
        %v806 = vrot.slane %v805, 4
        %v807 = vadd.f32 %v805, %v806
        %v808 = vrot.slane %v807, 2
        %v809 = vadd.f32 %v807, %v808
        %v810 = vrot.slane %v809, 1
        %v811 = vadd.f32 %v809, %v810
        %s812 = vtos %v811
        %v813 = vstv %s812
        %vm814 = vcmask 0
        %815 = vst.msk [vmem:[%s537] sm:$0x1] %vm814, %v813
        %p816 = scmp.lt.s32.totalorder %s33, 1
        %s817 = scalar_select %p816, %s33, 1
        %p818 = scmp.lt.s32.totalorder %s34, 1
        %s819 = scalar_select %p818, %s34, 1
        %s820 = smul.addr %s817, 2
        %s821 = sadd.s32 %s819, %s820
        %s822 = scalar_lea.vmem %s6, %s821
        // Predicated region
        $region69: #{tpu_custom_call.1} parent=43 // pred_check
          %p823 = pneg %p253
        $region70: #{tpu_custom_call.1} parent=43 // pred_check_branch
          %825 = sbr.rel (%p823) target = $region72
        $region71: #{tpu_custom_call.1} parent=43 // pred_region
          _
        $region72: #{tpu_custom_call.1} parent=43 // pred_fallthru
          _
      $region44: #{tpu_custom_call.1} parent=5 // pred_fallthru
        _
      %p826 = scmp.le.s32.totalorder 2, %s24
      // Predicated region
      $region73: #{tpu_custom_call.1} parent=5 // pred_check
        %p827 = pneg %p826
      $region74: #{tpu_custom_call.1} parent=5 // pred_check_branch
        %829 = sbr.rel (%p827) target = $region76
      $region75: #{tpu_custom_call.1} parent=5 // pred_region
        %s830 = ssub.s32 %s24, 2
        // Predicated region
        $region77: #{tpu_custom_call.1} parent=75 // pred_check
          %p831 = pneg %p259
        $region78: #{tpu_custom_call.1} parent=75 // pred_check_branch
          %833 = sbr.rel (%p831) target = $region80
        $region79: #{tpu_custom_call.1} parent=75 // pred_region
          %p834 = scmp.lt.s32.totalorder %s35, 1
          %s835 = scalar_select %p834, %s35, 1
          %p836 = scmp.lt.s32.totalorder %s36, 1
          %s837 = scalar_select %p836, %s36, 1
          %s838 = smul.addr %s835, 2
          %s839 = sadd.s32 %s837, %s838
          %s840 = scalar_lea.vmem %s6, %s839
        $region80: #{tpu_custom_call.1} parent=75 // pred_fallthru
          _
      $region76: #{tpu_custom_call.1} parent=5 // pred_fallthru
        _
    $region6: #{tpu_custom_call.1} parent=1 // loop_footer
      %s28 = sadd.s32 1, %s24
    $region7: #{tpu_custom_call.1} parent=1 // loop_footer_branch
      %23 = sbr.rel target = $region3
    $region8: #{tpu_custom_call.1} parent=1 // loop_exit
      _
    %841 = vsyncpa [#allocation3], 1
    %s842 = scalar_lea.sflag [#allocation3], 1
    %843 = vsyncpa %s842, 1
    %844 = vsyncpa [#allocation5], 1
    %s845 = scalar_lea.sflag [#allocation5], 1
    %846 = vsyncpa %s845, 1
    %847 = vsyncpa [#allocation8], 1
    %s848 = scalar_lea.sflag [#allocation8], 1
    %849 = vsyncpa %s848, 1
    %850 = vsyncpa [#allocation11], 1
    %s851 = scalar_lea.sflag [#allocation11], 1
    %852 = vsyncpa %s851, 1

</llo_original>
